<compile_context>
chip_gen: v7x
topology: tpu7x:2x2x1
jax: 0.10.0
libtpu: 0.0.40
codegen_flags: <defaults>
</compile_context>

<pallas_src>
import functools

import jax
import jax.numpy as jnp
from jax.experimental import pallas as pl
from jax.experimental.pallas import tpu as pltpu


def _round_up(x, m):
    return ((x + m - 1) // m) * m


# ---------------------------------------------------------------------------
# Kernel: three fused matmuls, bf16 MXU inputs, f32 accumulation/epilogue.
# ---------------------------------------------------------------------------
def _double_critics_kernel(s_ref, w1_ref, b1_ref, w2_ref, b2_ref, w3_ref, b3_ref,
                           out_ref):
    s = s_ref[...]                                                   # (bt, dimS) bf16

    # layer 1, both critics fused:           (bt, dimS) @ (dimS, 2*h1)
    h1 = jnp.dot(s, w1_ref[...], preferred_element_type=jnp.float32) + b1_ref[...]
    h1 = jnp.maximum(h1, 0.0).astype(jnp.bfloat16)

    # layer 2, value+adv paths of both critics (block-diagonal):
    #                                         (bt, 2*h1) @ (2*h1, 4*h2)
    h2 = jnp.dot(h1, w2_ref[...], preferred_element_type=jnp.float32) + b2_ref[...]
    h2 = jnp.maximum(h2, 0.0).astype(jnp.bfloat16)

    # heads, all four packed into one lane-dense slab:
    #                                         (bt, 4*h2) @ (4*h2, head_pad)
    # lanes [0,nA)=adv1, [nA,2nA)=adv2, [2nA,3nA)=val1(rep), [3nA,4nA)=val2(rep)
    out_ref[...] = (jnp.dot(h2, w3_ref[...], preferred_element_type=jnp.float32)
                    + b3_ref[...])


# ---------------------------------------------------------------------------
# Wrapper: grid over batch, weights resident, dueling epilogue in JAX.
# ---------------------------------------------------------------------------
def double_critics_forward(state, fused, nA, btile=512):
    """state: (B, dimS) f32. fused: dict from fuse_params(). Returns (q1, q2)."""
    B, dimS = state.shape
    head_pad = fused["w3f"].shape[1]

    # Pick a batch tile: multiple of 8, capped at `btile`; pad B to a multiple.
    bt = min(btile, _round_up(B, 8))
    B_pad = _round_up(B, bt)
    n_blocks = B_pad // bt

    s = state.astype(jnp.bfloat16)
    if B_pad != B:
        s = jnp.pad(s, ((0, B_pad - B), (0, 0)))

    w1, b1 = fused["w1f"], fused["b1f"]
    w2, b2 = fused["w2f"], fused["b2f"]
    w3, b3 = fused["w3f"], fused["b3f"]

    out = pl.pallas_call(
        _double_critics_kernel,
        out_shape=jax.ShapeDtypeStruct((B_pad, head_pad), jnp.float32),
        grid=(n_blocks,),
        in_specs=[
            pl.BlockSpec((bt, dimS), lambda i: (i, 0)),       # state: streamed
            pl.BlockSpec(w1.shape, lambda i: (0, 0)),         # weights/biases:
            pl.BlockSpec(b1.shape, lambda i: (0, 0)),         #   resident
            pl.BlockSpec(w2.shape, lambda i: (0, 0)),
            pl.BlockSpec(b2.shape, lambda i: (0, 0)),
            pl.BlockSpec(w3.shape, lambda i: (0, 0)),
            pl.BlockSpec(b3.shape, lambda i: (0, 0)),
        ],
        out_specs=pl.BlockSpec((bt, head_pad), lambda i: (i, 0)),
        compiler_params=pltpu.CompilerParams(
            dimension_semantics=("parallel",)),
    )(s, w1, b1, w2, b2, w3, b3)

    out = out[:B]
    adv1 = out[:, 0 * nA:1 * nA]
    adv2 = out[:, 1 * nA:2 * nA]
    val1 = out[:, 2 * nA:3 * nA]        # value column replicated over nA lanes
    val2 = out[:, 3 * nA:4 * nA]

    # PyTorch: x_adv.mean() is a GLOBAL mean over (batch, nA).
    q1 = adv1 + val1 - jnp.mean(adv1)
    q2 = adv2 + val2 - jnp.mean(adv2)
    return q1, q2


# ---------------------------------------------------------------------------
# Parameter construction / fusion (done once, not per call)
# ---------------------------------------------------------------------------
def init_params(key, dimS, nA, hidden1, hidden2):
    """PyTorch-Linear-style init: U(-1/sqrt(fan_in), 1/sqrt(fan_in)).
    Weights stored pre-transposed as (in_features, out_features)."""
    params = {}
    layer_defs = [
        ("w1", "b1", dimS, hidden1),
        ("w2", "b2", hidden1, hidden2),
        ("w2_adv", "b2_adv", hidden1, hidden2),
        ("w3", "b3", hidden2, 1),
        ("w3_adv", "b3_adv", hidden2, nA),
        ("w5", "b5", dimS, hidden1),
        ("w6", "b6", hidden1, hidden2),
        ("w6_adv", "b6_adv", hidden1, hidden2),
        ("w7", "b7", hidden2, 1),
        ("w7_adv", "b7_adv", hidden2, nA),
    ]
    keys = jax.random.split(key, 2 * len(layer_defs))
    for i, (wname, bname, fan_in, fan_out) in enumerate(layer_defs):
        bound = 1.0 / jnp.sqrt(float(fan_in))
        params[wname] = jax.random.uniform(
            keys[2 * i], (fan_in, fan_out), jnp.float32, -bound, bound)
        params[bname] = jax.random.uniform(
            keys[2 * i + 1], (1, fan_out), jnp.float32, -bound, bound)
    return params


def fuse_params(p, dimS, nA, hidden1, hidden2):
    """Pack the 20 per-layer tensors into 3 fused bf16 weights + 3 f32 biases."""
    f32 = jnp.float32
    bf16 = jnp.bfloat16
    head_pad = max(128, _round_up(4 * nA, 128))     # single lane-dense head slab

    # ---- layer 1: [w1 | w5] ----
    w1f = jnp.concatenate([p["w1"], p["w5"]], axis=1)            # (dimS, 2*h1)
    b1f = jnp.concatenate([p["b1"], p["b5"]], axis=1)            # (1, 2*h1)

    # ---- layer 2: block-diagonal [[w2, w2_adv, 0, 0], [0, 0, w6, w6_adv]] ----
    w2f = jnp.zeros((2 * hidden1, 4 * hidden2), f32)
    w2f = w2f.at[:hidden1, 0 * hidden2:1 * hidden2].set(p["w2"])
    w2f = w2f.at[:hidden1, 1 * hidden2:2 * hidden2].set(p["w2_adv"])
    w2f = w2f.at[hidden1:, 2 * hidden2:3 * hidden2].set(p["w6"])
    w2f = w2f.at[hidden1:, 3 * hidden2:4 * hidden2].set(p["w6_adv"])
    b2f = jnp.concatenate([p["b2"], p["b2_adv"], p["b6"], p["b6_adv"]], axis=1)

    # ---- layer 3 heads, one head_pad-wide slab ----
    # h2 layout along its 4*h2 axis: [x1_v | x1_adv | x2_v | x2_adv]
    # output lanes: [0,nA)=adv1, [nA,2nA)=adv2,
    #               [2nA,3nA)=val1 replicated, [3nA,4nA)=val2 replicated.
    w3f = jnp.zeros((4 * hidden2, head_pad), f32)
    b3f = jnp.zeros((1, head_pad), f32)
    w3f = w3f.at[1 * hidden2:2 * hidden2, 0 * nA:1 * nA].set(p["w3_adv"])
    w3f = w3f.at[3 * hidden2:4 * hidden2, 1 * nA:2 * nA].set(p["w7_adv"])
    w3f = w3f.at[0 * hidden2:1 * hidden2, 2 * nA:3 * nA].set(jnp.tile(p["w3"], (1, nA)))
    w3f = w3f.at[2 * hidden2:3 * hidden2, 3 * nA:4 * nA].set(jnp.tile(p["w7"], (1, nA)))
    b3f = b3f.at[:, 0 * nA:1 * nA].set(p["b3_adv"])
    b3f = b3f.at[:, 1 * nA:2 * nA].set(p["b7_adv"])
    b3f = b3f.at[:, 2 * nA:3 * nA].set(jnp.tile(p["b3"], (1, nA)))
    b3f = b3f.at[:, 3 * nA:4 * nA].set(jnp.tile(p["b7"], (1, nA)))

    return {"w1f": w1f.astype(bf16), "b1f": b1f,
            "w2f": w2f.astype(bf16), "b2f": b2f,
            "w3f": w3f.astype(bf16), "b3f": b3f}


# ---------------------------------------------------------------------------
# Pure-JAX f32 reference (num_layer == 2 PyTorch forward, unfused params)
# ---------------------------------------------------------------------------
def reference_forward(state, params):
    relu = lambda x: jnp.maximum(x, 0.0)
    lin = lambda x, w, b: x @ params[w] + params[b]

    x1 = relu(lin(state, "w1", "b1"))
    x1_adv = relu(lin(x1, "w2_adv", "b2_adv"))
    x1 = relu(lin(x1, "w2", "b2"))
    x1_adv = lin(x1_adv, "w3_adv", "b3_adv")
    x1 = lin(x1, "w3", "b3")

    x2 = relu(lin(state, "w5", "b5"))
    x2_adv = relu(lin(x2, "w6_adv", "b6_adv"))
    x2 = relu(lin(x2, "w6", "b6"))
    x2_adv = lin(x2_adv, "w7_adv", "b7_adv")
    x2 = lin(x2, "w7", "b7")

    return (x1 + x1_adv - jnp.mean(x1_adv), x2 + x2_adv - jnp.mean(x2_adv))


if __name__ == "__main__":
    # Small shapes consistent with the module: num_layer=2, dimS=16, nA=8,
    # hidden1=32, hidden2=32, batch=4.
    B, dimS, nA, hidden1, hidden2 = 4, 16, 8, 32, 32

    key = jax.random.PRNGKey(0)
    pkey, skey = jax.random.split(key)
    params = init_params(pkey, dimS, nA, hidden1, hidden2)
    fused = fuse_params(params, dimS, nA, hidden1, hidden2)   # one-time packing
    state = jax.random.normal(skey, (B, dimS), jnp.float32)

    q1, q2 = double_critics_forward(state, fused, nA)
    q1 = jax.block_until_ready(q1)
    q2 = jax.block_until_ready(q2)

    r1, r2 = reference_forward(state, params)
    assert q1.shape == (B, nA) and q2.shape == (B, nA)
    # bf16 MXU inputs vs f32 reference -> widened tolerance.
    assert jnp.allclose(q1, r1, atol=5e-2, rtol=5e-2)
    assert jnp.allclose(q2, r2, atol=5e-2, rtol=5e-2)

    print("KERNEL_OK")
</pallas_src>

<mosaic_0001>
module attributes {stable_mosaic.version = 11 : i64} {
  func.func @_double_critics_kernel(%arg0: i32, %arg1: memref<8x16xbf16, #tpu.memory_space<vmem>>, %arg2: memref<16x64xbf16, #tpu.memory_space<vmem>>, %arg3: memref<1x64xf32, #tpu.memory_space<vmem>>, %arg4: memref<64x128xbf16, #tpu.memory_space<vmem>>, %arg5: memref<1x128xf32, #tpu.memory_space<vmem>>, %arg6: memref<128x128xbf16, #tpu.memory_space<vmem>>, %arg7: memref<1x128xf32, #tpu.memory_space<vmem>>, %arg8: memref<8x128xf32, #tpu.memory_space<vmem>>) attributes {dimension_semantics = [#tpu.dimension_semantics<parallel>], iteration_bounds = array<i64: 1>, scalar_prefetch = 0 : i64, scratch_operands = 0 : i64, tpu.core_type = #tpu.core_type<tc>, window_params = [{transform_indices = @transform_0, window_bounds = array<i64: 8, 16>}, {pipeline_mode = #tpu.pipeline_mode<synchronous>, transform_indices = @transform_1, window_bounds = array<i64: 16, 64>}, {pipeline_mode = #tpu.pipeline_mode<synchronous>, transform_indices = @transform_2, window_bounds = array<i64: 1, 64>}, {pipeline_mode = #tpu.pipeline_mode<synchronous>, transform_indices = @transform_3, window_bounds = array<i64: 64, 128>}, {pipeline_mode = #tpu.pipeline_mode<synchronous>, transform_indices = @transform_4, window_bounds = array<i64: 1, 128>}, {pipeline_mode = #tpu.pipeline_mode<synchronous>, transform_indices = @transform_5, window_bounds = array<i64: 128, 128>}, {pipeline_mode = #tpu.pipeline_mode<synchronous>, transform_indices = @transform_6, window_bounds = array<i64: 1, 128>}, {transform_indices = @transform_7, window_bounds = array<i64: 8, 128>}]} {
    %c0 = arith.constant 0 : index
    %c0_0 = arith.constant 0 : index
    %0 = vector.load %arg1[%c0, %c0_0] : memref<8x16xbf16, #tpu.memory_space<vmem>>, vector<8x16xbf16>
    %c0_1 = arith.constant 0 : index
    %c0_2 = arith.constant 0 : index
    %1 = vector.load %arg2[%c0_1, %c0_2] : memref<16x64xbf16, #tpu.memory_space<vmem>>, vector<16x64xbf16>
    %cst = arith.constant dense<0.000000e+00> : vector<8x64xf32>
    %2 = tpu.matmul %0, %1, %cst {dimension_numbers = #tpu.dot_dimension_numbers<[1], [0], [0], [1], [0, 0, 1, 1], [], []>} : vector<8x16xbf16>, vector<16x64xbf16>, vector<8x64xf32> -> vector<8x64xf32>
    %c0_3 = arith.constant 0 : index
    %c0_4 = arith.constant 0 : index
    %3 = vector.load %arg3[%c0_3, %c0_4] : memref<1x64xf32, #tpu.memory_space<vmem>>, vector<1x64xf32>
    %4 = vector.broadcast %3 : vector<1x64xf32> to vector<8x64xf32>
    %5 = arith.addf %2, %4 : vector<8x64xf32>
    %cst_5 = arith.constant 0.000000e+00 : f32
    %6 = vector.broadcast %cst_5 : f32 to vector<8x64xf32>
    %7 = arith.maximumf %5, %6 : vector<8x64xf32>
    %8 = arith.truncf %7 : vector<8x64xf32> to vector<8x64xbf16>
    %c0_6 = arith.constant 0 : index
    %c0_7 = arith.constant 0 : index
    %9 = vector.load %arg4[%c0_6, %c0_7] : memref<64x128xbf16, #tpu.memory_space<vmem>>, vector<64x128xbf16>
    %cst_8 = arith.constant dense<0.000000e+00> : vector<8x128xf32>
    %10 = tpu.matmul %8, %9, %cst_8 {dimension_numbers = #tpu.dot_dimension_numbers<[1], [0], [0], [1], [0, 0, 1, 1], [], []>} : vector<8x64xbf16>, vector<64x128xbf16>, vector<8x128xf32> -> vector<8x128xf32>
    %c0_9 = arith.constant 0 : index
    %c0_10 = arith.constant 0 : index
    %11 = vector.load %arg5[%c0_9, %c0_10] : memref<1x128xf32, #tpu.memory_space<vmem>>, vector<1x128xf32>
    %12 = vector.broadcast %11 : vector<1x128xf32> to vector<8x128xf32>
    %13 = arith.addf %10, %12 : vector<8x128xf32>
    %cst_11 = arith.constant 0.000000e+00 : f32
    %14 = vector.broadcast %cst_11 : f32 to vector<8x128xf32>
    %15 = arith.maximumf %13, %14 : vector<8x128xf32>
    %16 = arith.truncf %15 : vector<8x128xf32> to vector<8x128xbf16>
    %c0_12 = arith.constant 0 : index
    %c0_13 = arith.constant 0 : index
    %17 = vector.load %arg6[%c0_12, %c0_13] : memref<128x128xbf16, #tpu.memory_space<vmem>>, vector<128x128xbf16>
    %cst_14 = arith.constant dense<0.000000e+00> : vector<8x128xf32>
    %18 = tpu.matmul %16, %17, %cst_14 {dimension_numbers = #tpu.dot_dimension_numbers<[1], [0], [0], [1], [0, 0, 1, 1], [], []>} : vector<8x128xbf16>, vector<128x128xbf16>, vector<8x128xf32> -> vector<8x128xf32>
    %c0_15 = arith.constant 0 : index
    %c0_16 = arith.constant 0 : index
    %19 = vector.load %arg7[%c0_15, %c0_16] : memref<1x128xf32, #tpu.memory_space<vmem>>, vector<1x128xf32>
    %20 = vector.broadcast %19 : vector<1x128xf32> to vector<8x128xf32>
    %21 = arith.addf %18, %20 : vector<8x128xf32>
    %c0_17 = arith.constant 0 : index
    %c0_18 = arith.constant 0 : index
    %22 = vector.load %arg8[%c0_17, %c0_18] : memref<8x128xf32, #tpu.memory_space<vmem>>, vector<8x128xf32>
    tpu.vector_store %arg8[%c0_17, %c0_18], %21 {strides = array<i32>} : memref<8x128xf32, #tpu.memory_space<vmem>>, vector<8x128xf32>,
    return
  }
  func.func @transform_0(%arg0: i32) -> (i32, i32) {
    %c0_i32 = arith.constant 0 : i32
    %c0_i32_0 = arith.constant 0 : i32
    return %arg0, %c0_i32 : i32, i32
  }
  func.func @transform_1(%arg0: i32) -> (i32, i32) {
    %c0_i32 = arith.constant 0 : i32
    %c0_i32_0 = arith.constant 0 : i32
    %c0_i32_1 = arith.constant 0 : i32
    return %c0_i32, %c0_i32_0 : i32, i32
  }
  func.func @transform_2(%arg0: i32) -> (i32, i32) {
    %c0_i32 = arith.constant 0 : i32
    %c0_i32_0 = arith.constant 0 : i32
    %c0_i32_1 = arith.constant 0 : i32
    return %c0_i32, %c0_i32_0 : i32, i32
  }
  func.func @transform_3(%arg0: i32) -> (i32, i32) {
    %c0_i32 = arith.constant 0 : i32
    %c0_i32_0 = arith.constant 0 : i32
    %c0_i32_1 = arith.constant 0 : i32
    return %c0_i32, %c0_i32_0 : i32, i32
  }
  func.func @transform_4(%arg0: i32) -> (i32, i32) {
    %c0_i32 = arith.constant 0 : i32
    %c0_i32_0 = arith.constant 0 : i32
    %c0_i32_1 = arith.constant 0 : i32
    return %c0_i32, %c0_i32_0 : i32, i32
  }
  func.func @transform_5(%arg0: i32) -> (i32, i32) {
    %c0_i32 = arith.constant 0 : i32
    %c0_i32_0 = arith.constant 0 : i32
    %c0_i32_1 = arith.constant 0 : i32
    return %c0_i32, %c0_i32_0 : i32, i32
  }
  func.func @transform_6(%arg0: i32) -> (i32, i32) {
    %c0_i32 = arith.constant 0 : i32
    %c0_i32_0 = arith.constant 0 : i32
    %c0_i32_1 = arith.constant 0 : i32
    return %c0_i32, %c0_i32_0 : i32, i32
  }
  func.func @transform_7(%arg0: i32) -> (i32, i32) {
    %c0_i32 = arith.constant 0 : i32
    %c0_i32_0 = arith.constant 0 : i32
    return %arg0, %c0_i32 : i32, i32
  }
}

</mosaic_0001>

<llo_original>
// kernel: tpu_custom_call.1
$region0: #{tpu_custom_call.1}
  #allocation0 [shape = 'u32[]', space=smem, size = 0x4, offset = 0x4, fixed_abs, tag = 'smem constant byte address 0x4 - core index']
  #allocation1 [shape = 'u32[144,128]{1,0:T(1,128)}', space=vmem, size = 0x12000, scoped, tag = 'internal scratch']
  %s0 = inlined_call_operand.hbm [shape: bf16[8,16], index: 0, kind: input, shape index: {}]
  %s1 = inlined_call_operand.hbm [shape: bf16[16,64], index: 1, kind: input, shape index: {}]
  %s2 = inlined_call_operand.vmem [shape: f32[1,64], index: 2, kind: input, shape index: {}]
  %s3 = inlined_call_operand.hbm [shape: bf16[64,128], index: 3, kind: input, shape index: {}]
  %s4 = inlined_call_operand.vmem [shape: f32[1,128], index: 4, kind: input, shape index: {}]
  %s5 = inlined_call_operand.hbm [shape: bf16[128,128], index: 5, kind: input, shape index: {}]
  %s6 = inlined_call_operand.vmem [shape: f32[1,128], index: 6, kind: input, shape index: {}]
  %s7 = inlined_call_operand.hbm [shape: f32[8,128], index: 7, kind: output, shape index: {}]
  %s8 = sld [smem:[#allocation0]]
  $region54: #{tpu_custom_call.1} parent=0
    _
  %s10 = ssub.s32 1, %s8
  %s11 = scalar_select 0, %s10, %s8
  $region1: #{tpu_custom_call.1} parent=0
    #allocation2 [shape = 'u8[2048]{0}', space=vmem, size = 0x800, scoped, tag = 'input window, operand 0, single buffered']
    #allocation3 [shape = 's32[1]{0}', space=sflag, size = 0x4, scoped, tag = 'scoped memory for tpu_custom_call.1']
    #allocation4 [shape = 's32[1]{0}', space=sflag, size = 0x4, scoped, tag = 'scoped memory for tpu_custom_call.1']
    #allocation5 [shape = 'u8[4096]{0}', space=vmem, size = 0x1000, scoped, tag = 'input window, operand 1, single buffered']
    #allocation6 [shape = 's32[1]{0}', space=sflag, size = 0x4, scoped, tag = 'scoped memory for tpu_custom_call.1']
    #allocation7 [shape = 'u8[16384]{0}', space=vmem, size = 0x4000, scoped, tag = 'input window, operand 3, single buffered']
    #allocation8 [shape = 'u8[32768]{0}', space=vmem, size = 0x8000, scoped, tag = 'input window, operand 5, single buffered']
    #allocation9 [shape = 's32[1]{0}', space=sflag, size = 0x4, scoped, tag = 'scoped memory for tpu_custom_call.1']
    #allocation10 [shape = 'u8[4096]{0}', space=vmem, size = 0x1000, scoped, tag = 'output window, operand 0, single buffered']
    %12 = vsyncpa [#allocation3], 0
    %13 = vsyncpa [#allocation6], 0
    %14 = vsyncpa [#allocation9], 0
    %15 = vsyncpa [#allocation4], 0
    // Predicated region
    $region2: #{tpu_custom_call.1} parent=1 // pred_check
      _
    $region3: #{tpu_custom_call.1} parent=1 // pred_check_branch
      %17 = sbr.rel (0) target = $region5
    $region4: #{tpu_custom_call.1} parent=1 // pred_region
      %s19 = ssub.s32 64, 64
      %20 = vsyncadd [#allocation3], %s19
      %s22 = sshll.u32 [#allocation2], 4
      %s23 = int_to_ptr.vmem [resolvable:$true] %s22
      %25 = dma.hbm_to_vmem [thread:$0]  %s0, 64, %s23, [#allocation3]
    $region5: #{tpu_custom_call.1} parent=1 // pred_fallthru
      _
    // Predicated region
    $region6: #{tpu_custom_call.1} parent=1 // pred_check
      _
    $region7: #{tpu_custom_call.1} parent=1 // pred_check_branch
      %27 = sbr.rel (0) target = $region9
    $region8: #{tpu_custom_call.1} parent=1 // pred_region
      %s29 = ssub.s32 128, 128
      %30 = vsyncadd [#allocation6], %s29
      %s31 = sshll.u32 [#allocation5], 4
      %s32 = int_to_ptr.vmem [resolvable:$true] %s31
      %37 = dma.hbm_to_vmem [thread:$0]  %s1, 128, %s32, [#allocation6], 64, 64, 4
    $region9: #{tpu_custom_call.1} parent=1 // pred_fallthru
      _
    // Predicated region
    $region10: #{tpu_custom_call.1} parent=1 // pred_check
      _
    $region11: #{tpu_custom_call.1} parent=1 // pred_check_branch
      %39 = sbr.rel (0) target = $region13
    $region12: #{tpu_custom_call.1} parent=1 // pred_region
      _
    $region13: #{tpu_custom_call.1} parent=1 // pred_fallthru
      _
    // Predicated region
    $region14: #{tpu_custom_call.1} parent=1 // pred_check
      _
    $region15: #{tpu_custom_call.1} parent=1 // pred_check_branch
      %41 = sbr.rel (0) target = $region17
    $region16: #{tpu_custom_call.1} parent=1 // pred_region
      %s43 = ssub.s32 512, 512
      %44 = vsyncadd [#allocation6], %s43
      %s45 = sshll.u32 [#allocation7], 4
      %s46 = int_to_ptr.vmem [resolvable:$true] %s45
      %51 = dma.hbm_to_vmem [thread:$0]  %s3, 512, %s46, [#allocation6], 64, 64, 4
    $region17: #{tpu_custom_call.1} parent=1 // pred_fallthru
      _
    // Predicated region
    $region18: #{tpu_custom_call.1} parent=1 // pred_check
      _
    $region19: #{tpu_custom_call.1} parent=1 // pred_check_branch
      %53 = sbr.rel (0) target = $region21
    $region20: #{tpu_custom_call.1} parent=1 // pred_region
      _
    $region21: #{tpu_custom_call.1} parent=1 // pred_fallthru
      _
    // Predicated region
    $region22: #{tpu_custom_call.1} parent=1 // pred_check
      _
    $region23: #{tpu_custom_call.1} parent=1 // pred_check_branch
      %55 = sbr.rel (0) target = $region25
    $region24: #{tpu_custom_call.1} parent=1 // pred_region
      %s57 = ssub.s32 1024, 1024
      %58 = vsyncadd [#allocation9], %s57
      %s59 = sshll.u32 [#allocation8], 4
      %s60 = int_to_ptr.vmem [resolvable:$true] %s59
      %65 = dma.hbm_to_vmem [thread:$0]  %s5, 1024, %s60, [#allocation9], 64, 64, 4
    $region25: #{tpu_custom_call.1} parent=1 // pred_fallthru
      _
    // Predicated region
    $region26: #{tpu_custom_call.1} parent=1 // pred_check
      _
    $region27: #{tpu_custom_call.1} parent=1 // pred_check_branch
      %67 = sbr.rel (0) target = $region29
    $region28: #{tpu_custom_call.1} parent=1 // pred_region
      _
    $region29: #{tpu_custom_call.1} parent=1 // pred_fallthru
      _
    // Predicated region
    $region30: #{tpu_custom_call.1} parent=1 // pred_check
      _
    $region31: #{tpu_custom_call.1} parent=1 // pred_check_branch
      %69 = sbr.rel (0) target = $region33
    $region32: #{tpu_custom_call.1} parent=1 // pred_region
      %70 = dma.done [#allocation3], 64
    $region33: #{tpu_custom_call.1} parent=1 // pred_fallthru
      _
    // Predicated region
    $region34: #{tpu_custom_call.1} parent=1 // pred_check
      _
    $region35: #{tpu_custom_call.1} parent=1 // pred_check_branch
      %72 = sbr.rel (0) target = $region37
    $region36: #{tpu_custom_call.1} parent=1 // pred_region
      %73 = dma.done [#allocation6], 128
    $region37: #{tpu_custom_call.1} parent=1 // pred_fallthru
      _
    // Predicated region
    $region38: #{tpu_custom_call.1} parent=1 // pred_check
      _
    $region39: #{tpu_custom_call.1} parent=1 // pred_check_branch
      %75 = sbr.rel (0) target = $region41
    $region40: #{tpu_custom_call.1} parent=1 // pred_region
      %76 = dma.done [#allocation6], 512
    $region41: #{tpu_custom_call.1} parent=1 // pred_fallthru
      _
    // Predicated region
    $region42: #{tpu_custom_call.1} parent=1 // pred_check
      _
    $region43: #{tpu_custom_call.1} parent=1 // pred_check_branch
      %78 = sbr.rel (0) target = $region45
    $region44: #{tpu_custom_call.1} parent=1 // pred_region
      %79 = dma.done [#allocation9], 1024
    $region45: #{tpu_custom_call.1} parent=1 // pred_fallthru
      _
    %v81 = vld [vmem:[#allocation2] sm:$0xf]
    %v82 = vld [vmem:[#allocation5] sm:$0xf]
    %v83 = vld [vmem:[#allocation5 + $0x4] sm:$0xf]
    %v84 = vld [vmem:[%s2] sm:$0x1]
    %v86 = vlaneseq
    %v87 = vshrl.u32 %v86, 7
    %v88 = vsub.s32 0, %v87
    %v89 = vrot.slane %v84, %v88
    %v93 = vunpack.c.l.b16 %v82
    %v94 = vunpack.c.l.b16 %v83
    %v95 = vpack.c.b16 %v94, %v93
    %vm97 = vcmask 130048
    %v99 = vsel %vm97, %v81, 0
    %101 = vmatprep.subr.bf16.mxu0 0
    %102 = vmatpush1.bf16.msra.mxu0 %v95
    %103 = vmatprep.subr.bf16.mxu0 0
    %104 = vmatpush1.bf16.msra.mxu0 0
    %105 = vmatprep.subr.bf16.mxu0 0
    %106 = vmatpush1.bf16.msra.mxu0 0
    %107 = vmatprep.subr.bf16.mxu0 0
    %108 = vmatpush1.bf16.msra.mxu0 0
    %109 = vmatprep.subr.bf16.mxu0 0
    %110 = vmatpush1.bf16.msra.mxu0 0
    %111 = vmatprep.subr.bf16.mxu0 0
    %112 = vmatpush1.bf16.msra.mxu0 0
    %113 = vmatprep.subr.bf16.mxu0 0
    %114 = vmatpush1.bf16.msra.mxu0 0
    %115 = vmatprep.subr.bf16.mxu0 0
    %116 = vmatpush1.bf16.msra.mxu0 0
    %117 = vmatprep.subr.bf16.mxu0 0
    %118 = vmatpush1.bf16.msra.mxu0 0
    %119 = vmatprep.subr.bf16.mxu0 0
    %120 = vmatpush1.bf16.msra.mxu0 0
    %121 = vmatprep.subr.bf16.mxu0 0
    %122 = vmatpush1.bf16.msra.mxu0 0
    %123 = vmatprep.subr.bf16.mxu0 0
    %124 = vmatpush1.bf16.msra.mxu0 0
    %125 = vmatprep.subr.bf16.mxu0 0
    %126 = vmatpush1.bf16.msra.mxu0 0
    %127 = vmatprep.subr.bf16.mxu0 0
    %128 = vmatpush1.bf16.msra.mxu0 0
    %129 = vmatprep.subr.bf16.mxu0 0
    %130 = vmatpush1.bf16.msra.mxu0 0
    %131 = vmatprep.subr.bf16.mxu0 0
    %132 = vmatpush1.bf16.msra.mxu0 0
    %133 = vmatprep.mubr.bf16.mxu0 0
    %134 = vmatmul.mubr.bf16.gmra.mrb[0].mxu0 %v99
    %v135 = vpop.f32.mrb[0].mxu0
    %v136 = vadd.f32 %v89, %v135
    %v137 = vpop.f32.mrb[0].mxu0
    %v138 = vpop.f32.mrb[0].mxu0
    %v139 = vpop.f32.mrb[0].mxu0
    %140 = vdwg.mxu0
    %v141 = vmax.f32 %v136, 0.0
    %v142 = vpack.c.bf16 %v141, %v141
    %v143 = vld [vmem:[#allocation7] sm:$0xf]
    %v144 = vld [vmem:[#allocation7 + $0x4] sm:$0xf]
    %v145 = vld [vmem:[#allocation7 + $0x8] sm:$0xf]
    %v146 = vld [vmem:[#allocation7 + $0xc] sm:$0xf]
    %v147 = vld [vmem:[#allocation7 + $0x10] sm:$0xf]
    %v148 = vld [vmem:[#allocation7 + $0x14] sm:$0xf]
    %v149 = vld [vmem:[#allocation7 + $0x18] sm:$0xf]
    %v150 = vld [vmem:[#allocation7 + $0x1c] sm:$0xf]
    %v151 = vld [vmem:[%s4] sm:$0x1]
    %v153 = vlaneseq
    %v154 = vshrl.u32 %v153, 7
    %v155 = vsub.s32 0, %v154
    %v156 = vrot.slane %v151, %v155
    %v166 = vunpack.c.l.b16 %v143
    %v167 = vunpack.c.l.b16 %v144
    %v168 = vunpack.c.l.b16 %v145
    %v169 = vunpack.c.l.b16 %v146
    %v170 = vunpack.c.l.b16 %v147
    %v171 = vunpack.c.l.b16 %v148
    %v172 = vunpack.c.l.b16 %v149
    %v173 = vunpack.c.l.b16 %v150
    %v174 = vpack.c.b16 %v167, %v166
    %v175 = vpack.c.b16 %v169, %v168
    %v176 = vpack.c.b16 %v171, %v170
    %v177 = vpack.c.b16 %v173, %v172
    %vm182 = vcmask 523264
    %v184 = vsel %vm182, %v142, 0
    %186 = vmatprep.subr.bf16.mxu0 0
    %187 = vmatpush1.bf16.msra.mxu0 %v174
    %188 = vmatprep.subr.bf16.mxu0 0
    %189 = vmatpush1.bf16.msra.mxu0 %v175
    %190 = vmatprep.subr.bf16.mxu0 0
    %191 = vmatpush1.bf16.msra.mxu0 %v176
    %192 = vmatprep.subr.bf16.mxu0 0
    %193 = vmatpush1.bf16.msra.mxu0 %v177
    %194 = vmatprep.subr.bf16.mxu0 0
    %195 = vmatpush1.bf16.msra.mxu0 0
    %196 = vmatprep.subr.bf16.mxu0 0
    %197 = vmatpush1.bf16.msra.mxu0 0
    %198 = vmatprep.subr.bf16.mxu0 0
    %199 = vmatpush1.bf16.msra.mxu0 0
    %200 = vmatprep.subr.bf16.mxu0 0
    %201 = vmatpush1.bf16.msra.mxu0 0
    %202 = vmatprep.subr.bf16.mxu0 0
    %203 = vmatpush1.bf16.msra.mxu0 0
    %204 = vmatprep.subr.bf16.mxu0 0
    %205 = vmatpush1.bf16.msra.mxu0 0
    %206 = vmatprep.subr.bf16.mxu0 0
    %207 = vmatpush1.bf16.msra.mxu0 0
    %208 = vmatprep.subr.bf16.mxu0 0
    %209 = vmatpush1.bf16.msra.mxu0 0
    %210 = vmatprep.subr.bf16.mxu0 0
    %211 = vmatpush1.bf16.msra.mxu0 0
    %212 = vmatprep.subr.bf16.mxu0 0
    %213 = vmatpush1.bf16.msra.mxu0 0
    %214 = vmatprep.subr.bf16.mxu0 0
    %215 = vmatpush1.bf16.msra.mxu0 0
    %216 = vmatprep.subr.bf16.mxu0 0
    %217 = vmatpush1.bf16.msra.mxu0 0
    %218 = vmatprep.mubr.bf16.mxu0 0
    %219 = vmatmul.mubr.bf16.gmra.mrb[0].mxu0 %v184
    %v220 = vpop.f32.mrb[0].mxu0
    %v221 = vadd.f32 %v156, %v220
    %v222 = vpop.f32.mrb[0].mxu0
    %v223 = vpop.f32.mrb[0].mxu0
    %v224 = vpop.f32.mrb[0].mxu0
    %225 = vdwg.mxu0
    %v226 = vmax.f32 %v221, 0.0
    %v227 = vpack.c.bf16 %v226, %v226
    %v228 = vld [vmem:[#allocation8] sm:$0xf]
    %v229 = vld [vmem:[#allocation8 + $0x4] sm:$0xf]
    %v230 = vld [vmem:[#allocation8 + $0x8] sm:$0xf]
    %v231 = vld [vmem:[#allocation8 + $0xc] sm:$0xf]
    %v232 = vld [vmem:[#allocation8 + $0x10] sm:$0xf]
    %v233 = vld [vmem:[#allocation8 + $0x14] sm:$0xf]
    %v234 = vld [vmem:[#allocation8 + $0x18] sm:$0xf]
    %v235 = vld [vmem:[#allocation8 + $0x1c] sm:$0xf]
    %v236 = vld [vmem:[#allocation8 + $0x20] sm:$0xf]
    %v237 = vld [vmem:[#allocation8 + $0x24] sm:$0xf]
    %v238 = vld [vmem:[#allocation8 + $0x28] sm:$0xf]
    %v239 = vld [vmem:[#allocation8 + $0x2c] sm:$0xf]
    %v240 = vld [vmem:[#allocation8 + $0x30] sm:$0xf]
    %v241 = vld [vmem:[#allocation8 + $0x34] sm:$0xf]
    %v242 = vld [vmem:[#allocation8 + $0x38] sm:$0xf]
    %v243 = vld [vmem:[#allocation8 + $0x3c] sm:$0xf]
    %v244 = vld [vmem:[%s6] sm:$0x1]
    %v246 = vlaneseq
    %v247 = vshrl.u32 %v246, 7
    %v248 = vsub.s32 0, %v247
    %v249 = vrot.slane %v244, %v248
    %v267 = vunpack.c.l.b16 %v228
    %v268 = vunpack.c.l.b16 %v229
    %v269 = vunpack.c.l.b16 %v230
    %v270 = vunpack.c.l.b16 %v231
    %v271 = vunpack.c.l.b16 %v232
    %v272 = vunpack.c.l.b16 %v233
    %v273 = vunpack.c.l.b16 %v234
    %v274 = vunpack.c.l.b16 %v235
    %v275 = vunpack.c.l.b16 %v236
    %v276 = vunpack.c.l.b16 %v237
    %v277 = vunpack.c.l.b16 %v238
    %v278 = vunpack.c.l.b16 %v239
    %v279 = vunpack.c.l.b16 %v240
    %v280 = vunpack.c.l.b16 %v241
    %v281 = vunpack.c.l.b16 %v242
    %v282 = vunpack.c.l.b16 %v243
    %v283 = vpack.c.b16 %v268, %v267
    %v284 = vpack.c.b16 %v270, %v269
    %v285 = vpack.c.b16 %v272, %v271
    %v286 = vpack.c.b16 %v274, %v273
    %v287 = vpack.c.b16 %v276, %v275
    %v288 = vpack.c.b16 %v278, %v277
    %v289 = vpack.c.b16 %v280, %v279
    %v290 = vpack.c.b16 %v282, %v281
    %299 = vmatprep.subr.bf16.mxu0 0
    %300 = vmatpush1.bf16.msra.mxu0 %v283
    %301 = vmatprep.subr.bf16.mxu0 0
    %302 = vmatpush1.bf16.msra.mxu0 %v284
    %303 = vmatprep.subr.bf16.mxu0 0
    %304 = vmatpush1.bf16.msra.mxu0 %v285
    %305 = vmatprep.subr.bf16.mxu0 0
    %306 = vmatpush1.bf16.msra.mxu0 %v286
    %307 = vmatprep.subr.bf16.mxu0 0
    %308 = vmatpush1.bf16.msra.mxu0 %v287
    %309 = vmatprep.subr.bf16.mxu0 0
    %310 = vmatpush1.bf16.msra.mxu0 %v288
    %311 = vmatprep.subr.bf16.mxu0 0
    %312 = vmatpush1.bf16.msra.mxu0 %v289
    %313 = vmatprep.subr.bf16.mxu0 0
    %314 = vmatpush1.bf16.msra.mxu0 %v290
    %315 = vmatprep.subr.bf16.mxu0 0
    %316 = vmatpush1.bf16.msra.mxu0 0
    %317 = vmatprep.subr.bf16.mxu0 0
    %318 = vmatpush1.bf16.msra.mxu0 0
    %319 = vmatprep.subr.bf16.mxu0 0
    %320 = vmatpush1.bf16.msra.mxu0 0
    %321 = vmatprep.subr.bf16.mxu0 0
    %322 = vmatpush1.bf16.msra.mxu0 0
    %323 = vmatprep.subr.bf16.mxu0 0
    %324 = vmatpush1.bf16.msra.mxu0 0
    %325 = vmatprep.subr.bf16.mxu0 0
    %326 = vmatpush1.bf16.msra.mxu0 0
    %327 = vmatprep.subr.bf16.mxu0 0
    %328 = vmatpush1.bf16.msra.mxu0 0
    %329 = vmatprep.subr.bf16.mxu0 0
    %330 = vmatpush1.bf16.msra.mxu0 0
    %331 = vmatprep.mubr.bf16.mxu0 0
    %332 = vmatmul.mubr.bf16.gmra.mrb[0].mxu0 %v227
    %v333 = vpop.f32.mrb[0].mxu0
    %v334 = vadd.f32 %v249, %v333
    %v335 = vpop.f32.mrb[0].mxu0
    %v336 = vpop.f32.mrb[0].mxu0
    %v337 = vpop.f32.mrb[0].mxu0
    %338 = vdwg.mxu0
    %339 = vst [vmem:[#allocation10] sm:$0xff] %v334
    // Predicated region
    $region46: #{tpu_custom_call.1} parent=1 // pred_check
      _
    $region47: #{tpu_custom_call.1} parent=1 // pred_check_branch
      %341 = sbr.rel (0) target = $region49
    $region48: #{tpu_custom_call.1} parent=1 // pred_region
      %s343 = ssub.s32 128, 128
      %344 = vsyncadd [#allocation4], %s343
      %s346 = sshll.u32 [#allocation10], 4
      %s347 = int_to_ptr.vmem [resolvable:$true] %s346
      %349 = dma.vmem_to_hbm [thread:$0]  %s347, 128, %s7, [#allocation4]
    $region49: #{tpu_custom_call.1} parent=1 // pred_fallthru
      _
    // Predicated region
    $region50: #{tpu_custom_call.1} parent=1 // pred_check
      _
    $region51: #{tpu_custom_call.1} parent=1 // pred_check_branch
      %351 = sbr.rel (0) target = $region53
    $region52: #{tpu_custom_call.1} parent=1 // pred_region
      %352 = dma.done [#allocation4], 128
    $region53: #{tpu_custom_call.1} parent=1 // pred_fallthru
      _
    %353 = vsyncpa [#allocation3], 1
    %354 = vsyncpa [#allocation6], 1
    %355 = vsyncpa [#allocation9], 1
    %356 = vsyncpa [#allocation4], 1

</llo_original>
